<compile_context>
chip_gen: v5e
topology: v5e:2x2
jax: 0.10.0
libtpu: 0.0.40
codegen_flags: <defaults>
</compile_context>

<pallas_src>
import jax
import jax.numpy as jnp
from jax.experimental import pallas as pl
from jax.experimental.pallas import tpu as pltpu


def _copy_kernel(x_ref, o_ref):
    # hot path: move one (rb, C) tile of the reinterpreted buffer
    o_ref[...] = x_ref[...]


def _round_up(a, b):
    return ((a + b - 1) // b) * b


def _vmem_capacity_bytes():
    """Physical VMEM per core; conservative fallback if the query fails."""
    try:
        cap = int(pltpu.get_tpu_info().vmem_capacity_bytes)
        if cap > 0:
            return cap
    except Exception:
        pass
    return 64 << 20  # v7x-sized fallback (safe lower bound across v5e/v6e/v7x)


def make_square(x, dim, *, use_view_fast_path=False, max_tile_bytes=None):
    """Pallas implementation of makeSquare.forward: x.resize(dim, dim)."""
    n = dim * dim
    dtype = x.dtype
    itemsize = jnp.dtype(dtype).itemsize
    flat = x.reshape(-1)          # glue: row-major flatten of the NCHW buffer
    num_el = flat.shape[0]

    if use_view_fast_path and num_el >= n:
        # Pure reinterpretation of a contiguous buffer: no data movement needed,
        # let XLA express it as a slice + reshape instead of an extra HBM pass.
        return flat[:n].reshape(dim, dim)

    if num_el < n:
        # TODO(synk): torch resize_ leaves this tail as uninitialized memory; we
        # zero-fill deterministically.  Doing the fill in-kernel (clamped
        # index_map + pl.when) would avoid this extra XLA pad pass, but the
        # path is rare so it is kept in the wrapper for simplicity.
        flat = jnp.concatenate([flat, jnp.zeros((n - num_el,), dtype)])

    # ---- lane-dense working layout -----------------------------------------
    # An output last-dim below 128 lowers to masked partial stores (vst.msk);
    # for small dims we therefore copy the flat buffer as an (n//128, 128) slab
    # and reshape to (dim, dim) afterwards (a free contiguous reshape).
    if dim < 128 and n % 128 == 0:
        C = 128
        R = n // C
    else:
        C = dim        # full-array last dim: always a legal block width
        R = dim
    src = flat[:n].reshape(R, C)   # glue: contiguous view of the buffer

    # ---- dtype-aware sublane packing ----------------------------------------
    # sub-32-bit dtypes pack along sublanes: min row block 8 / 16 / 32 for
    # 4 / 2 / 1-byte dtypes.
    pack = max(8, (4 // max(1, itemsize)) * 8)

    # ---- VMEM-budget-derived row block ---------------------------------------
    vmem_cap = _vmem_capacity_bytes()
    vmem_limit = int(min(64 << 20, vmem_cap // 2))   # 32 MiB on v7x, 64 MiB v5e/v6e
    # in + out specs, each double-buffered => ~4 live tiles; keep them well
    # inside the limit.  ~4 MiB tiles sit on the measured HBM-roofline plateau.
    default_tile = min(4 << 20, vmem_limit // 8)
    tile_budget = default_tile if max_tile_bytes is None else int(max_tile_bytes)

    rb = (tile_budget // (C * itemsize) // pack) * pack
    rb = max(rb, pack)
    rb = min(rb, _round_up(R, pack))
    if R <= pack:
        rb = R        # full-extent block in the sublane dim (always legal)

    grid = (pl.cdiv(R, rb),)      # partial last block is masked by Pallas

    out = pl.pallas_call(
        _copy_kernel,
        out_shape=jax.ShapeDtypeStruct((R, C), dtype),
        grid=grid,
        in_specs=[pl.BlockSpec((rb, C), lambda i: (i, 0))],
        out_specs=pl.BlockSpec((rb, C), lambda i: (i, 0)),
        compiler_params=pltpu.CompilerParams(
            # "parallel": on v7x the row blocks shard across both TensorCores;
            # neutral on v5e/v6e.
            dimension_semantics=("parallel",),
            vmem_limit_bytes=vmem_limit,
        ),
        cost_estimate=pl.CostEstimate(
            flops=0,
            transcendentals=0,
            bytes_accessed=2 * n * itemsize,
        ),
    )(src)

    return out.reshape(dim, dim)   # glue: free contiguous reshape


if __name__ == "__main__":
    key = jax.random.PRNGKey(0)
    # NCHW input: batch=2, channels=4, spatial=16x16 -> 2048 elements.
    x = jax.random.normal(key, (2, 4, 16, 16), dtype=jnp.float32)

    def ref_make_square(a, dim):
        n = dim * dim
        flat = jnp.reshape(a, (-1,))
        if flat.shape[0] < n:
            flat = jnp.concatenate(
                [flat, jnp.zeros((n - flat.shape[0],), flat.dtype)])
        return flat[:n].reshape(dim, dim)

    # 1) the module's nominal case: dim=32 (lane-dense (8,128) path, f32)
    dim = 32
    out = jax.block_until_ready(make_square(x, dim))
    assert out.shape == (dim, dim) and out.dtype == x.dtype
    assert jnp.array_equal(out, ref_make_square(x, dim))

    # 2) dim not a multiple of 128/8, forced small tiles -> multi-block grid
    #    (exercises pl.cdiv gridding + partial last-block masking)
    dim = 36
    out = jax.block_until_ready(make_square(x, dim, max_tile_bytes=8 * 36 * 4))
    assert jnp.array_equal(out, ref_make_square(x, dim))

    # 3) pad path: fewer elements than dim*dim -> zero-filled tail
    dim = 64
    out = jax.block_until_ready(make_square(x, dim))
    assert jnp.array_equal(out, ref_make_square(x, dim))

    # 4) bf16 input (dtype-aware sublane packing path)
    xb = x.astype(jnp.bfloat16)
    dim = 32
    out = jax.block_until_ready(make_square(xb, dim))
    assert out.dtype == jnp.bfloat16
    assert jnp.array_equal(out, ref_make_square(xb, dim))

    # 5) optional view fast path (no kernel) matches the kernel result
    dim = 32
    out_view = jax.block_until_ready(make_square(x, dim, use_view_fast_path=True))
    assert jnp.array_equal(out_view, ref_make_square(x, dim))

    print("KERNEL_OK")
</pallas_src>

<mosaic_0001>
module attributes {stable_mosaic.version = 11 : i64} {
  func.func @_copy_kernel(%arg0: i32, %arg1: memref<8x128xf32, #tpu.memory_space<vmem>>, %arg2: memref<8x128xf32, #tpu.memory_space<vmem>>) attributes {dimension_semantics = [#tpu.dimension_semantics<parallel>], iteration_bounds = array<i64: 1>, scalar_prefetch = 0 : i64, scratch_operands = 0 : i64, tpu.core_type = #tpu.core_type<tc>, window_params = [{transform_indices = @transform_0, window_bounds = array<i64: 8, 128>}, {transform_indices = @transform_1, window_bounds = array<i64: 8, 128>}]} {
    %c0 = arith.constant 0 : index
    %c0_0 = arith.constant 0 : index
    %0 = vector.load %arg1[%c0, %c0_0] : memref<8x128xf32, #tpu.memory_space<vmem>>, vector<8x128xf32>
    %c0_1 = arith.constant 0 : index
    %c0_2 = arith.constant 0 : index
    %1 = vector.load %arg2[%c0_1, %c0_2] : memref<8x128xf32, #tpu.memory_space<vmem>>, vector<8x128xf32>
    tpu.vector_store %arg2[%c0_1, %c0_2], %0 {strides = array<i32>} : memref<8x128xf32, #tpu.memory_space<vmem>>, vector<8x128xf32>,
    return
  }
  func.func @transform_0(%arg0: i32) -> (i32, i32) {
    %c0_i32 = arith.constant 0 : i32
    %c0_i32_0 = arith.constant 0 : i32
    return %arg0, %c0_i32 : i32, i32
  }
  func.func @transform_1(%arg0: i32) -> (i32, i32) {
    %c0_i32 = arith.constant 0 : i32
    %c0_i32_0 = arith.constant 0 : i32
    return %arg0, %c0_i32 : i32, i32
  }
}

</mosaic_0001>

<llo_original>
// kernel: tpu_custom_call.1
$region0: #{tpu_custom_call.1}
  #allocation0 [shape = 'u32[]', space=smem, size = 0x4, offset = 0x4, fixed_abs, tag = 'smem constant byte address 0x4 - core index']
  #allocation1 [shape = 'u32[72,128]{1,0:T(1,128)}', space=vmem, size = 0x9000, scoped, tag = 'internal scratch']
  %s0 = inlined_call_operand.hbm [shape: f32[8,128], index: 0, kind: input, shape index: {}]
  %s1 = inlined_call_operand.hbm [shape: f32[8,128], index: 1, kind: output, shape index: {}]
  %s2 = sld [smem:[#allocation0]]
  $region18: #{tpu_custom_call.1} parent=0
    _
  %s4 = ssub.s32 1, %s2
  %s5 = scalar_select 0, %s4, %s2
  $region1: #{tpu_custom_call.1} parent=0
    #allocation2 [shape = 'u8[4096]{0}', space=vmem, size = 0x1000, scoped, tag = 'input window, operand 0, single buffered']
    #allocation3 [shape = 's32[1]{0}', space=sflag, size = 0x4, scoped, tag = 'scoped memory for tpu_custom_call.1']
    #allocation4 [shape = 's32[1]{0}', space=sflag, size = 0x4, scoped, tag = 'scoped memory for tpu_custom_call.1']
    #allocation5 [shape = 'u8[4096]{0}', space=vmem, size = 0x1000, scoped, tag = 'output window, operand 0, single buffered']
    %6 = vsyncpa [#allocation3], 0
    %7 = vsyncpa [#allocation4], 0
    // Predicated region
    $region2: #{tpu_custom_call.1} parent=1 // pred_check
      _
    $region3: #{tpu_custom_call.1} parent=1 // pred_check_branch
      %9 = sbr.rel (0) target = $region5
    $region4: #{tpu_custom_call.1} parent=1 // pred_region
      %11 = vsyncadd [#allocation3], 0
      %s13 = sshll.u32 %s0, 4
      %s14 = int_to_ptr.hbm [resolvable:$true] %s13
      %s15 = sshll.u32 [#allocation2], 4
      %s16 = int_to_ptr.vmem [resolvable:$true] %s15
      %18 = dma.hbm_to_vmem [thread:$0]  %s14, 128, %s16, [#allocation3]
    $region5: #{tpu_custom_call.1} parent=1 // pred_fallthru
      _
    // Predicated region
    $region6: #{tpu_custom_call.1} parent=1 // pred_check
      _
    $region7: #{tpu_custom_call.1} parent=1 // pred_check_branch
      %20 = sbr.rel (0) target = $region9
    $region8: #{tpu_custom_call.1} parent=1 // pred_region
      %22 = dma.done [#allocation3], 128
    $region9: #{tpu_custom_call.1} parent=1 // pred_fallthru
      _
    %v23 = vld [vmem:[#allocation2] sm:$0xff]
    %24 = vst [vmem:[#allocation5] sm:$0xff] %v23
    // Predicated region
    $region10: #{tpu_custom_call.1} parent=1 // pred_check
      _
    $region11: #{tpu_custom_call.1} parent=1 // pred_check_branch
      %26 = sbr.rel (0) target = $region13
    $region12: #{tpu_custom_call.1} parent=1 // pred_region
      %28 = vsyncadd [#allocation4], 0
      %s30 = sshll.u32 [#allocation5], 4
      %s31 = int_to_ptr.vmem [resolvable:$true] %s30
      %s32 = sshll.u32 %s1, 4
      %s33 = int_to_ptr.hbm [resolvable:$true] %s32
      %35 = dma.vmem_to_hbm [thread:$0]  %s31, 128, %s33, [#allocation4]
    $region13: #{tpu_custom_call.1} parent=1 // pred_fallthru
      _
    // Predicated region
    $region14: #{tpu_custom_call.1} parent=1 // pred_check
      _
    $region15: #{tpu_custom_call.1} parent=1 // pred_check_branch
      %37 = sbr.rel (0) target = $region17
    $region16: #{tpu_custom_call.1} parent=1 // pred_region
      %39 = dma.done [#allocation4], 128
    $region17: #{tpu_custom_call.1} parent=1 // pred_fallthru
      _
    %40 = vsyncpa [#allocation3], 1
    %41 = vsyncpa [#allocation4], 1

</llo_original>
